<compile_context>
chip_gen: v7x
topology: tpu7x:2x2x1
jax: 0.10.0
libtpu: 0.0.40
codegen_flags: <defaults>
</compile_context>

<pallas_src>
import math
from functools import partial
from typing import NamedTuple

import jax
import jax.numpy as jnp
from jax import lax
from jax.experimental import pallas as pl
from jax.experimental.pallas import tpu as pltpu


def _round_up(v, m):
    return (v + m - 1) // m * m


class LinearRNNParams(NamedTuple):
    wx: jax.Array  # (Ip, Np)  rows = input features,  cols = [hidden | logits]
    wh: jax.Array  # (Hp, Np)  rows = hidden features, cols = [hidden | logits]
    b: jax.Array   # (1,  Np)  fused bias, f32


def prepare_params(w_i2h, b_i2h, w_i2o, b_i2o, input_size,
                   compute_dtype=jnp.bfloat16):
    """One-time parameter prep (hoisted out of the per-step path).

    Pre-transposes, fuses i2h/i2o into a single [hidden | logits] output slab,
    zero-pads every axis to lane-dense sizes, and casts to the MXU dtype.
    """
    H = w_i2h.shape[0]
    O = w_i2o.shape[0]
    I = int(input_size)
    assert w_i2h.shape[1] == I + H and w_i2o.shape[1] == I + H

    Ip, Hp, Op = _round_up(I, 128), _round_up(H, 128), _round_up(O, 128)
    Np = Hp + Op

    wx = jnp.zeros((Ip, Np), jnp.float32)
    wx = wx.at[:I, :H].set(w_i2h[:, :I].T)
    wx = wx.at[:I, Hp:Hp + O].set(w_i2o[:, :I].T)

    wh = jnp.zeros((Hp, Np), jnp.float32)
    wh = wh.at[:H, :H].set(w_i2h[:, I:].T)
    wh = wh.at[:H, Hp:Hp + O].set(w_i2o[:, I:].T)

    b = jnp.zeros((1, Np), jnp.float32)
    b = b.at[0, :H].set(b_i2h)
    b = b.at[0, Hp:Hp + O].set(b_i2o)

    return LinearRNNParams(wx.astype(compute_dtype), wh.astype(compute_dtype), b)


def init_hidden(hidden_size, batch=1):
    """Equivalent of LinearRNN.initHidden."""
    return jnp.zeros((batch, hidden_size), jnp.float32)


def _linear_rnn_kernel(x_ref, h0_ref, wx_ref, wh_ref, b_ref,
                       out_ref, hfin_ref, h_carry, *, hp, o_valid):
    """One fused RNN step per (batch-tile, timestep) grid point.

    y      = x_t @ Wx + h_{t-1} @ Wh + b     (TB, Hp+Op)  -- one MXU out pass
    h_t    = y[:, :Hp]                       carried in VMEM scratch (f32)
    out_t  = log_softmax(y[:, Hp:])          padded lanes masked before LSE
    """
    t = pl.program_id(1)

    # Load the (padded) initial hidden into the VMEM carry at the first step
    # of every batch tile.
    @pl.when(t == 0)
    def _():
        h_carry[...] = h0_ref[...]

    y = (jnp.dot(x_ref[...], wx_ref[...], preferred_element_type=jnp.float32)
         + jnp.dot(h_carry[...].astype(wh_ref.dtype), wh_ref[...],
                   preferred_element_type=jnp.float32)
         + b_ref[...])

    # New hidden: 128-aligned static slice; padded lanes stay exact zeros
    # (zero weight columns + zero bias), so the carry is exact.
    hnew = y[:, :hp]
    h_carry[...] = hnew

    # Logits with padded lanes masked so they contribute nothing to max / LSE.
    logits = y[:, hp:]
    lane = lax.broadcasted_iota(jnp.int32, logits.shape, dimension=1)
    logits = jnp.where(lane < o_valid, logits, jnp.float32(-1e30))

    # Numerically stable log-softmax over dim=1 (f32 epilogue on all chips).
    m = jnp.max(logits, axis=1, keepdims=True)
    shifted = logits - m
    lse = jnp.log(jnp.sum(jnp.exp(shifted), axis=1, keepdims=True))
    out_ref[...] = (shifted - lse).astype(out_ref.dtype)

    # Final hidden written once per batch tile, at the last timestep.
    @pl.when(t == pl.num_programs(1) - 1)
    def _():
        hfin_ref[...] = hnew.astype(hfin_ref.dtype)


def _batch_tiling(B):
    """Padded batch and batch-tile sizes."""
    Bp = _round_up(B, 8)
    if Bp <= 256:
        return Bp, Bp
    # TODO(synk): per-generation tuning -- 128-row tiles on v5e (4x128 MXUs),
    # 256 on v6e/v7x; keep Bp/TB >= 2 on v7x so both TensorCores get work.
    TB = 256
    return _round_up(Bp, TB), TB


def _sequence_padded(params, xs_p, h0_p, *, o_valid):
    """Fused T-step RNN on padded, lane-dense layouts.

    xs_p: (T, Bp, Ip) in the MXU compute dtype; h0_p: (Bp, Hp) f32.
    Returns (log-probs (T, Bp, Op) f32, final hidden (Bp, Hp) f32).
    """
    wx, wh, b = params
    T, Bp, Ip = xs_p.shape
    Hp, Np = wh.shape
    Op = Np - Hp
    TB = Bp if Bp <= 256 else 256

    # Resident-VMEM estimate: double-buffered inputs/outputs + weight slabs
    # + the f32 hidden carry.  Only raise the scoped limit when needed.
    w_bytes = (wx.size * wx.dtype.itemsize + wh.size * wh.dtype.itemsize
               + b.size * b.dtype.itemsize)
    tile_bytes = (TB * Ip * xs_p.dtype.itemsize   # x_t tile
                  + TB * Hp * 4                   # h0 tile
                  + TB * Op * 4 + TB * Hp * 4)    # output tiles
    needed = 2 * (w_bytes + tile_bytes) + TB * Hp * 4
    vmem_limit = int(needed * 1.5) if needed > 12 * 1024 * 1024 else None

    kernel = partial(_linear_rnn_kernel, hp=Hp, o_valid=o_valid)

    out_p, hT_p = pl.pallas_call(
        kernel,
        out_shape=(
            jax.ShapeDtypeStruct((T, Bp, Op), jnp.float32),
            jax.ShapeDtypeStruct((Bp, Hp), jnp.float32),
        ),
        grid_spec=pltpu.PrefetchScalarGridSpec(
            num_scalar_prefetch=0,
            grid=(Bp // TB, T),
            in_specs=[
                pl.BlockSpec((None, TB, Ip), lambda bt, t: (t, bt, 0)),  # x_t
                pl.BlockSpec((TB, Hp), lambda bt, t: (bt, 0)),           # h0
                pl.BlockSpec((Ip, Np), lambda bt, t: (0, 0)),            # Wx (resident)
                pl.BlockSpec((Hp, Np), lambda bt, t: (0, 0)),            # Wh (resident)
                pl.BlockSpec((1, Np), lambda bt, t: (0, 0)),             # fused bias
            ],
            out_specs=[
                pl.BlockSpec((None, TB, Op), lambda bt, t: (t, bt, 0)),  # log-probs
                pl.BlockSpec((TB, Hp), lambda bt, t: (bt, 0)),           # final hidden
            ],
            scratch_shapes=[pltpu.VMEM((TB, Hp), jnp.float32)],          # hidden carry
        ),
        # Reuse the padded hidden input buffer for the final-hidden output.
        input_output_aliases={1: 1},
        compiler_params=pltpu.CompilerParams(
            dimension_semantics=("parallel", "arbitrary"),
            vmem_limit_bytes=vmem_limit,
        ),
    )(xs_p, h0_p, wx, wh, b)
    return out_p, hT_p


@partial(jax.jit, static_argnames=("output_size",))
def linear_rnn_sequence(params, xs, h0, *, output_size):
    """Run T fused RNN steps. xs: (T, B, I), h0: (B, H) -> ((T, B, O), (B, H))."""
    T, B, I = xs.shape
    H = h0.shape[1]
    Ip = params.wx.shape[0]
    Hp = params.wh.shape[0]
    O = output_size

    Bp, _ = _batch_tiling(B)
    # Activation padding happens once per sequence (not per step); padded
    # lanes/rows are exact zeros so they contribute nothing to the dots.
    xs_p = jnp.zeros((T, Bp, Ip), params.wx.dtype).at[:, :B, :I].set(
        xs.astype(params.wx.dtype))
    h0_p = jnp.zeros((Bp, Hp), jnp.float32).at[:B, :H].set(
        h0.astype(jnp.float32))

    out_p, hT_p = _sequence_padded(params, xs_p, h0_p, o_valid=O)
    return out_p[:, :B, :O], hT_p[:B, :H]


@partial(jax.jit, static_argnames=("output_size",))
def linear_rnn_forward(params, x, hidden, *, output_size):
    """Single-step forward, exactly matching LinearRNN.forward(input, hidden)."""
    out, hnew = linear_rnn_sequence(params, x[None], hidden,
                                    output_size=output_size)
    return out[0], hnew


if __name__ == "__main__":
    # Small shapes consistent with the module's forward.
    batch = 4
    input_size = 16
    hidden_size = 32
    output_size = 8
    seq_len = 8

    key = jax.random.PRNGKey(0)
    k_x, k_h, k_w1, k_b1, k_w2, k_b2 = jax.random.split(key, 6)

    xs = jax.random.normal(k_x, (seq_len, batch, input_size), dtype=jnp.float32)
    h0 = jax.random.normal(k_h, (batch, hidden_size), dtype=jnp.float32)

    # nn.Linear default init: U(-1/sqrt(fan_in), 1/sqrt(fan_in)), fan_in = I+H.
    fan_in = input_size + hidden_size
    bound = 1.0 / math.sqrt(fan_in)
    w_i2h = jax.random.uniform(k_w1, (hidden_size, fan_in),
                               minval=-bound, maxval=bound, dtype=jnp.float32)
    b_i2h = jax.random.uniform(k_b1, (hidden_size,),
                               minval=-bound, maxval=bound, dtype=jnp.float32)
    w_i2o = jax.random.uniform(k_w2, (output_size, fan_in),
                               minval=-bound, maxval=bound, dtype=jnp.float32)
    b_i2o = jax.random.uniform(k_b2, (output_size,),
                               minval=-bound, maxval=bound, dtype=jnp.float32)

    # Pure-JAX reference, faithful to the PyTorch module (f32).
    def ref_step(x, h):
        combined = jnp.concatenate([x, h], axis=1)
        hnew = combined @ w_i2h.T + b_i2h
        logits = combined @ w_i2o.T + b_i2o
        return jax.nn.log_softmax(logits, axis=1), hnew

    def ref_sequence(xs_, h):
        outs = []
        for t in range(xs_.shape[0]):
            o, h = ref_step(xs_[t], h)
            outs.append(o)
        return jnp.stack(outs), h

    outs_ref, hT_ref = ref_sequence(xs, h0)

    # 1) Exact-semantics check: single step, f32 compute path (tight tol).
    params_f32 = prepare_params(w_i2h, b_i2h, w_i2o, b_i2o, input_size,
                                compute_dtype=jnp.float32)
    out1, h1 = linear_rnn_forward(params_f32, xs[0], h0,
                                  output_size=output_size)
    jax.block_until_ready((out1, h1))
    out1_ref, h1_ref = ref_step(xs[0], h0)
    assert out1.shape == (batch, output_size)
    assert h1.shape == (batch, hidden_size)
    assert jnp.allclose(out1, out1_ref, atol=1e-5, rtol=1e-5), "step output mismatch"
    assert jnp.allclose(h1, h1_ref, atol=1e-5, rtol=1e-5), "step hidden mismatch"

    # 2) Fused time loop (hidden carried in VMEM), f32 compute path.
    outs_f32, hT_f32 = linear_rnn_sequence(params_f32, xs, h0,
                                           output_size=output_size)
    jax.block_until_ready((outs_f32, hT_f32))
    assert outs_f32.shape == (seq_len, batch, output_size)
    assert hT_f32.shape == (batch, hidden_size)
    assert jnp.allclose(outs_f32, outs_ref, atol=1e-4, rtol=1e-4), "seq output mismatch (f32)"
    assert jnp.allclose(hT_f32, hT_ref, atol=1e-4, rtol=1e-4), "seq hidden mismatch (f32)"

    # 3) Fused time loop, bf16 MXU path (default perf configuration).
    params_bf16 = prepare_params(w_i2h, b_i2h, w_i2o, b_i2o, input_size)
    outs_bf, hT_bf = linear_rnn_sequence(params_bf16, xs, h0,
                                         output_size=output_size)
    jax.block_until_ready((outs_bf, hT_bf))
    assert jnp.allclose(outs_bf, outs_ref, atol=5e-2, rtol=5e-2), "seq output mismatch (bf16)"
    assert jnp.allclose(hT_bf, hT_ref, atol=5e-2, rtol=5e-2), "seq hidden mismatch (bf16)"

    print("KERNEL_OK")
</pallas_src>

<mosaic_0001>
module attributes {stable_mosaic.version = 11 : i64} {
  func.func @_linear_rnn_kernel(%arg0: i32, %arg1: i32, %arg2: memref<1x8x128xf32, #tpu.memory_space<vmem>>, %arg3: memref<8x128xf32, #tpu.memory_space<vmem>>, %arg4: memref<128x256xf32, #tpu.memory_space<vmem>>, %arg5: memref<128x256xf32, #tpu.memory_space<vmem>>, %arg6: memref<1x256xf32, #tpu.memory_space<vmem>>, %arg7: memref<1x8x128xf32, #tpu.memory_space<vmem>>, %arg8: memref<8x128xf32, #tpu.memory_space<vmem>>, %arg9: memref<8x128xf32, #tpu.memory_space<vmem>>) attributes {dimension_semantics = [#tpu.dimension_semantics<parallel>, #tpu.dimension_semantics<arbitrary>], iteration_bounds = array<i64: 1, 1>, scalar_prefetch = 0 : i64, scratch_operands = 1 : i64, tpu.core_type = #tpu.core_type<tc>, window_params = [{transform_indices = @transform_0, window_bounds = array<i64: 1, 8, 128>}, {transform_indices = @transform_1, window_bounds = array<i64: 8, 128>}, {pipeline_mode = #tpu.pipeline_mode<synchronous>, transform_indices = @transform_2, window_bounds = array<i64: 128, 256>}, {pipeline_mode = #tpu.pipeline_mode<synchronous>, transform_indices = @transform_3, window_bounds = array<i64: 128, 256>}, {pipeline_mode = #tpu.pipeline_mode<synchronous>, transform_indices = @transform_4, window_bounds = array<i64: 1, 256>}, {transform_indices = @transform_5, window_bounds = array<i64: 1, 8, 128>}, {transform_indices = @transform_6, window_bounds = array<i64: 8, 128>}]} {
    %c0_i32 = arith.constant 0 : i32
    %0 = arith.cmpi eq, %arg1, %c0_i32 : i32
    %1 = arith.extui %0 : i1 to i32
    %c0_i32_0 = arith.constant 0 : i32
    %2 = arith.cmpi ne, %1, %c0_i32_0 : i32
    scf.if %2 {
      %c0_22 = arith.constant 0 : index
      %c0_23 = arith.constant 0 : index
      %38 = vector.load %arg3[%c0_22, %c0_23] : memref<8x128xf32, #tpu.memory_space<vmem>>, vector<8x128xf32>
      %c0_24 = arith.constant 0 : index
      %c0_25 = arith.constant 0 : index
      %39 = vector.load %arg9[%c0_24, %c0_25] : memref<8x128xf32, #tpu.memory_space<vmem>>, vector<8x128xf32>
      tpu.vector_store %arg9[%c0_24, %c0_25], %38 {strides = array<i32>} : memref<8x128xf32, #tpu.memory_space<vmem>>, vector<8x128xf32>,
    } else {
    }
    %c0 = arith.constant 0 : index
    %c0_1 = arith.constant 0 : index
    %c0_2 = arith.constant 0 : index
    %3 = vector.load %arg2[%c0, %c0_1, %c0_2] : memref<1x8x128xf32, #tpu.memory_space<vmem>>, vector<1x8x128xf32>
    %4 = vector.shape_cast %3 : vector<1x8x128xf32> to vector<8x128xf32>
    %c0_3 = arith.constant 0 : index
    %c0_4 = arith.constant 0 : index
    %5 = vector.load %arg4[%c0_3, %c0_4] : memref<128x256xf32, #tpu.memory_space<vmem>>, vector<128x256xf32>
    %cst = arith.constant dense<0.000000e+00> : vector<8x256xf32>
    %6 = tpu.matmul %4, %5, %cst {dimension_numbers = #tpu.dot_dimension_numbers<[1], [0], [0], [1], [0, 0, 1, 1], [], []>} : vector<8x128xf32>, vector<128x256xf32>, vector<8x256xf32> -> vector<8x256xf32>
    %c0_5 = arith.constant 0 : index
    %c0_6 = arith.constant 0 : index
    %7 = vector.load %arg9[%c0_5, %c0_6] : memref<8x128xf32, #tpu.memory_space<vmem>>, vector<8x128xf32>
    %c0_7 = arith.constant 0 : index
    %c0_8 = arith.constant 0 : index
    %8 = vector.load %arg5[%c0_7, %c0_8] : memref<128x256xf32, #tpu.memory_space<vmem>>, vector<128x256xf32>
    %cst_9 = arith.constant dense<0.000000e+00> : vector<8x256xf32>
    %9 = tpu.matmul %7, %8, %cst_9 {dimension_numbers = #tpu.dot_dimension_numbers<[1], [0], [0], [1], [0, 0, 1, 1], [], []>} : vector<8x128xf32>, vector<128x256xf32>, vector<8x256xf32> -> vector<8x256xf32>
    %10 = arith.addf %6, %9 : vector<8x256xf32>
    %c0_10 = arith.constant 0 : index
    %c0_11 = arith.constant 0 : index
    %11 = vector.load %arg6[%c0_10, %c0_11] : memref<1x256xf32, #tpu.memory_space<vmem>>, vector<1x256xf32>
    %12 = vector.broadcast %11 : vector<1x256xf32> to vector<8x256xf32>
    %13 = arith.addf %10, %12 : vector<8x256xf32>
    %14 = vector.extract_strided_slice %13 {offsets = [0, 0], sizes = [8, 128], strides = [1, 1]} : vector<8x256xf32> to vector<8x128xf32>
    %c0_12 = arith.constant 0 : index
    %c0_13 = arith.constant 0 : index
    %15 = vector.load %arg9[%c0_12, %c0_13] : memref<8x128xf32, #tpu.memory_space<vmem>>, vector<8x128xf32>
    tpu.vector_store %arg9[%c0_12, %c0_13], %14 {strides = array<i32>} : memref<8x128xf32, #tpu.memory_space<vmem>>, vector<8x128xf32>,
    %16 = vector.extract_strided_slice %13 {offsets = [0, 128], sizes = [8, 128], strides = [1, 1]} : vector<8x256xf32> to vector<8x128xf32>
    %17 = tpu.iota {dimensions = array<i32: 1>} : vector<8x128xi32>
    %c8_i32 = arith.constant 8 : i32
    %18 = vector.broadcast %c8_i32 : i32 to vector<8x128xi32>
    %19 = arith.cmpi slt, %17, %18 : vector<8x128xi32>
    %cst_14 = arith.constant -1.000000e+30 : f32
    %20 = vector.broadcast %cst_14 : f32 to vector<8x128xf32>
    %21 = arith.select %19, %16, %20 : vector<8x128xi1>, vector<8x128xf32>
    %cst_15 = arith.constant dense<0xFF800000> : vector<8xf32>
    %22 = vector.multi_reduction <maximumf>, %21, %cst_15 [1] : vector<8x128xf32> to vector<8xf32>
    %23 = vector.shape_cast %22 : vector<8xf32> to vector<8x1xf32>
    %24 = vector.broadcast %23 : vector<8x1xf32> to vector<8x128xf32>
    %25 = arith.subf %21, %24 : vector<8x128xf32>
    %26 = math.exp %25 : vector<8x128xf32>
    %cst_16 = arith.constant dense<0.000000e+00> : vector<8xf32>
    %27 = vector.multi_reduction <add>, %26, %cst_16 [1] : vector<8x128xf32> to vector<8xf32>
    %28 = vector.shape_cast %27 : vector<8xf32> to vector<8x1xf32>
    %29 = math.log %28 : vector<8x1xf32>
    %30 = vector.broadcast %29 : vector<8x1xf32> to vector<8x128xf32>
    %31 = arith.subf %25, %30 : vector<8x128xf32>
    %c0_17 = arith.constant 0 : index
    %c0_18 = arith.constant 0 : index
    %c0_19 = arith.constant 0 : index
    %32 = vector.load %arg7[%c0_17, %c0_18, %c0_19] : memref<1x8x128xf32, #tpu.memory_space<vmem>>, vector<1x8x128xf32>
    %33 = vector.shape_cast %32 : vector<1x8x128xf32> to vector<8x128xf32>
    %34 = vector.shape_cast %31 : vector<8x128xf32> to vector<1x8x128xf32>
    tpu.vector_store %arg7[%c0_17, %c0_18, %c0_19], %34 {strides = array<i32>} : memref<1x8x128xf32, #tpu.memory_space<vmem>>, vector<1x8x128xf32>,
    %c0_i32_20 = arith.constant 0 : i32
    %35 = arith.cmpi eq, %arg1, %c0_i32_20 : i32
    %36 = arith.extui %35 : i1 to i32
    %c0_i32_21 = arith.constant 0 : i32
    %37 = arith.cmpi ne, %36, %c0_i32_21 : i32
    scf.if %37 {
      %c0_22 = arith.constant 0 : index
      %c0_23 = arith.constant 0 : index
      %38 = vector.load %arg8[%c0_22, %c0_23] : memref<8x128xf32, #tpu.memory_space<vmem>>, vector<8x128xf32>
      tpu.vector_store %arg8[%c0_22, %c0_23], %14 {strides = array<i32>} : memref<8x128xf32, #tpu.memory_space<vmem>>, vector<8x128xf32>,
    } else {
    }
    return
  }
  func.func @transform_0(%arg0: i32, %arg1: i32) -> (i32, i32, i32) {
    %c0_i32 = arith.constant 0 : i32
    %c0_i32_0 = arith.constant 0 : i32
    return %arg1, %arg0, %c0_i32 : i32, i32, i32
  }
  func.func @transform_1(%arg0: i32, %arg1: i32) -> (i32, i32) {
    %c0_i32 = arith.constant 0 : i32
    %c0_i32_0 = arith.constant 0 : i32
    return %arg0, %c0_i32 : i32, i32
  }
  func.func @transform_2(%arg0: i32, %arg1: i32) -> (i32, i32) {
    %c0_i32 = arith.constant 0 : i32
    %c0_i32_0 = arith.constant 0 : i32
    %c0_i32_1 = arith.constant 0 : i32
    return %c0_i32, %c0_i32_0 : i32, i32
  }
  func.func @transform_3(%arg0: i32, %arg1: i32) -> (i32, i32) {
    %c0_i32 = arith.constant 0 : i32
    %c0_i32_0 = arith.constant 0 : i32
    %c0_i32_1 = arith.constant 0 : i32
    return %c0_i32, %c0_i32_0 : i32, i32
  }
  func.func @transform_4(%arg0: i32, %arg1: i32) -> (i32, i32) {
    %c0_i32 = arith.constant 0 : i32
    %c0_i32_0 = arith.constant 0 : i32
    %c0_i32_1 = arith.constant 0 : i32
    return %c0_i32, %c0_i32_0 : i32, i32
  }
  func.func @transform_5(%arg0: i32, %arg1: i32) -> (i32, i32, i32) {
    %c0_i32 = arith.constant 0 : i32
    %c0_i32_0 = arith.constant 0 : i32
    return %arg1, %arg0, %c0_i32 : i32, i32, i32
  }
  func.func @transform_6(%arg0: i32, %arg1: i32) -> (i32, i32) {
    %c0_i32 = arith.constant 0 : i32
    %c0_i32_0 = arith.constant 0 : i32
    return %arg0, %c0_i32 : i32, i32
  }
}

</mosaic_0001>

<llo_original>
// kernel: linear_rnn_sequence.1
$region0: #{linear_rnn_sequence.1}
  #allocation0 [shape = 'u32[]', space=smem, size = 0x4, offset = 0x4, fixed_abs, tag = 'smem constant byte address 0x4 - core index']
  #allocation1 [shape = 'u32[144,128]{1,0:T(1,128)}', space=vmem, size = 0x12000, scoped, tag = 'internal scratch']
  #allocation2 [shape = 'f32[8,128]{1,0:T(8,128)}', space=vmem, size = 0x1000, scoped, tag = 'scratch operand']
  %s0 = inlined_call_operand.vmem [shape: f32[1,8,128], index: 0, kind: input, shape index: {}]
  %s1 = inlined_call_operand.vmem [shape: f32[8,128], index: 1, kind: input, shape index: {}, may-alias: {1,6}]
  %s2 = inlined_call_operand.hbm [shape: f32[128,256], index: 2, kind: input, shape index: {}]
  %s3 = inlined_call_operand.hbm [shape: f32[128,256], index: 3, kind: input, shape index: {}]
  %s4 = inlined_call_operand.vmem [shape: f32[1,256], index: 4, kind: input, shape index: {}]
  %s5 = inlined_call_operand.vmem [shape: f32[1,8,128], index: 5, kind: output, shape index: {0}]
  %s6 = inlined_call_operand.vmem [shape: f32[8,128], index: 6, kind: output, shape index: {1}, may-alias: {1,6}]
  %7 = xla_tuple %s5, %s6
  %s8 = sld [smem:[#allocation0]]
  $region54: #{linear_rnn_sequence.1} parent=0
    _
  %s10 = ssub.s32 1, %s8
  %s11 = scalar_select 0, %s10, %s8
  $region1: #{linear_rnn_sequence.1} parent=0
    #allocation3 [shape = 'u8[131072]{0}', space=vmem, size = 0x20000, scoped, tag = 'input window, operand 2, single buffered']
    #allocation4 [shape = 's32[1]{0}', space=sflag, size = 0x4, scoped, tag = 'scoped memory for linear_rnn_sequence.1']
    #allocation5 [shape = 'u8[131072]{0}', space=vmem, size = 0x20000, scoped, tag = 'input window, operand 3, single buffered']
    #allocation6 [shape = 's32[1]{0}', space=sflag, size = 0x4, scoped, tag = 'scoped memory for linear_rnn_sequence.1']
    %12 = vsyncpa [#allocation4], 0
    %13 = vsyncpa [#allocation6], 0
    // Predicated region
    $region2: #{linear_rnn_sequence.1} parent=1 // pred_check
      _
    $region3: #{linear_rnn_sequence.1} parent=1 // pred_check_branch
      %15 = sbr.rel (0) target = $region5
    $region4: #{linear_rnn_sequence.1} parent=1 // pred_region
      _
    $region5: #{linear_rnn_sequence.1} parent=1 // pred_fallthru
      _
    // Predicated region
    $region6: #{linear_rnn_sequence.1} parent=1 // pred_check
      _
    $region7: #{linear_rnn_sequence.1} parent=1 // pred_check_branch
      %17 = sbr.rel (0) target = $region9
    $region8: #{linear_rnn_sequence.1} parent=1 // pred_region
      _
    $region9: #{linear_rnn_sequence.1} parent=1 // pred_fallthru
      _
    // Predicated region
    $region10: #{linear_rnn_sequence.1} parent=1 // pred_check
      _
    $region11: #{linear_rnn_sequence.1} parent=1 // pred_check_branch
      %19 = sbr.rel (0) target = $region13
    $region12: #{linear_rnn_sequence.1} parent=1 // pred_region
      %s21 = ssub.s32 4096, 4096
      %22 = vsyncadd [#allocation4], %s21
      %s23 = sshll.u32 [#allocation3], 4
      %s24 = int_to_ptr.vmem [resolvable:$true] %s23
      %29 = dma.hbm_to_vmem [thread:$0]  %s2, 4096, %s24, [#allocation4], 256, 256, 16
    $region13: #{linear_rnn_sequence.1} parent=1 // pred_fallthru
      _
    // Predicated region
    $region14: #{linear_rnn_sequence.1} parent=1 // pred_check
      _
    $region15: #{linear_rnn_sequence.1} parent=1 // pred_check_branch
      %31 = sbr.rel (0) target = $region17
    $region16: #{linear_rnn_sequence.1} parent=1 // pred_region
      %s33 = ssub.s32 4096, 4096
      %34 = vsyncadd [#allocation6], %s33
      %s35 = sshll.u32 [#allocation5], 4
      %s36 = int_to_ptr.vmem [resolvable:$true] %s35
      %41 = dma.hbm_to_vmem [thread:$0]  %s3, 4096, %s36, [#allocation6], 256, 256, 16
    $region17: #{linear_rnn_sequence.1} parent=1 // pred_fallthru
      _
    // Predicated region
    $region18: #{linear_rnn_sequence.1} parent=1 // pred_check
      _
    $region19: #{linear_rnn_sequence.1} parent=1 // pred_check_branch
      %43 = sbr.rel (0) target = $region21
    $region20: #{linear_rnn_sequence.1} parent=1 // pred_region
      _
    $region21: #{linear_rnn_sequence.1} parent=1 // pred_fallthru
      _
    // Predicated region
    $region22: #{linear_rnn_sequence.1} parent=1 // pred_check
      _
    $region23: #{linear_rnn_sequence.1} parent=1 // pred_check_branch
      %45 = sbr.rel (0) target = $region25
    $region24: #{linear_rnn_sequence.1} parent=1 // pred_region
      %46 = dma.done [#allocation4], 4096
    $region25: #{linear_rnn_sequence.1} parent=1 // pred_fallthru
      _
    // Predicated region
    $region26: #{linear_rnn_sequence.1} parent=1 // pred_check
      _
    $region27: #{linear_rnn_sequence.1} parent=1 // pred_check_branch
      %48 = sbr.rel (0) target = $region29
    $region28: #{linear_rnn_sequence.1} parent=1 // pred_region
      %49 = dma.done [#allocation6], 4096
    $region29: #{linear_rnn_sequence.1} parent=1 // pred_fallthru
      _
    %p50 = scmp.eq.s32.totalorder 0, 0
    // Predicated region
    $region30: #{linear_rnn_sequence.1} parent=1 // pred_check
      %p51 = pneg %p50
    $region31: #{linear_rnn_sequence.1} parent=1 // pred_check_branch
      %53 = sbr.rel (%p51) target = $region33
    $region32: #{linear_rnn_sequence.1} parent=1 // pred_region
      %v54 = vld [vmem:[%s1] sm:$0xff]
      %55 = vst [vmem:[#allocation2] sm:$0xff] %v54
    $region33: #{linear_rnn_sequence.1} parent=1 // pred_fallthru
      _
    %v56 = vld [vmem:[%s0] sm:$0xff]
    %v57 = vld [vmem:[#allocation3] sm:$0xff]
    %v58 = vld [vmem:[#allocation3 + $0x8] sm:$0xff]
    %v59 = vld [vmem:[#allocation3 + $0x10] sm:$0xff]
    %v60 = vld [vmem:[#allocation3 + $0x18] sm:$0xff]
    %v61 = vld [vmem:[#allocation3 + $0x20] sm:$0xff]
    %v62 = vld [vmem:[#allocation3 + $0x28] sm:$0xff]
    %v63 = vld [vmem:[#allocation3 + $0x30] sm:$0xff]
    %v64 = vld [vmem:[#allocation3 + $0x38] sm:$0xff]
    %v65 = vld [vmem:[#allocation3 + $0x40] sm:$0xff]
    %v66 = vld [vmem:[#allocation3 + $0x48] sm:$0xff]
    %v67 = vld [vmem:[#allocation3 + $0x50] sm:$0xff]
    %v68 = vld [vmem:[#allocation3 + $0x58] sm:$0xff]
    %v69 = vld [vmem:[#allocation3 + $0x60] sm:$0xff]
    %v70 = vld [vmem:[#allocation3 + $0x68] sm:$0xff]
    %v71 = vld [vmem:[#allocation3 + $0x70] sm:$0xff]
    %v72 = vld [vmem:[#allocation3 + $0x78] sm:$0xff]
    %v73 = vld [vmem:[#allocation3 + $0x80] sm:$0xff]
    %v74 = vld [vmem:[#allocation3 + $0x88] sm:$0xff]
    %v75 = vld [vmem:[#allocation3 + $0x90] sm:$0xff]
    %v76 = vld [vmem:[#allocation3 + $0x98] sm:$0xff]
    %v77 = vld [vmem:[#allocation3 + $0xa0] sm:$0xff]
    %v78 = vld [vmem:[#allocation3 + $0xa8] sm:$0xff]
    %v79 = vld [vmem:[#allocation3 + $0xb0] sm:$0xff]
    %v80 = vld [vmem:[#allocation3 + $0xb8] sm:$0xff]
    %v81 = vld [vmem:[#allocation3 + $0xc0] sm:$0xff]
    %v82 = vld [vmem:[#allocation3 + $0xc8] sm:$0xff]
    %v83 = vld [vmem:[#allocation3 + $0xd0] sm:$0xff]
    %v84 = vld [vmem:[#allocation3 + $0xd8] sm:$0xff]
    %v85 = vld [vmem:[#allocation3 + $0xe0] sm:$0xff]
    %v86 = vld [vmem:[#allocation3 + $0xe8] sm:$0xff]
    %v87 = vld [vmem:[#allocation3 + $0xf0] sm:$0xff]
    %v88 = vld [vmem:[#allocation3 + $0xf8] sm:$0xff]
    %v89 = vld [vmem:[#allocation2] sm:$0xff]
    %v90 = vld [vmem:[#allocation5] sm:$0xff]
    %v91 = vld [vmem:[#allocation5 + $0x8] sm:$0xff]
    %v92 = vld [vmem:[#allocation5 + $0x10] sm:$0xff]
    %v93 = vld [vmem:[#allocation5 + $0x18] sm:$0xff]
    %v94 = vld [vmem:[#allocation5 + $0x20] sm:$0xff]
    %v95 = vld [vmem:[#allocation5 + $0x28] sm:$0xff]
    %v96 = vld [vmem:[#allocation5 + $0x30] sm:$0xff]
    %v97 = vld [vmem:[#allocation5 + $0x38] sm:$0xff]
    %v98 = vld [vmem:[#allocation5 + $0x40] sm:$0xff]
    %v99 = vld [vmem:[#allocation5 + $0x48] sm:$0xff]
    %v100 = vld [vmem:[#allocation5 + $0x50] sm:$0xff]
    %v101 = vld [vmem:[#allocation5 + $0x58] sm:$0xff]
    %v102 = vld [vmem:[#allocation5 + $0x60] sm:$0xff]
    %v103 = vld [vmem:[#allocation5 + $0x68] sm:$0xff]
    %v104 = vld [vmem:[#allocation5 + $0x70] sm:$0xff]
    %v105 = vld [vmem:[#allocation5 + $0x78] sm:$0xff]
    %v106 = vld [vmem:[#allocation5 + $0x80] sm:$0xff]
    %v107 = vld [vmem:[#allocation5 + $0x88] sm:$0xff]
    %v108 = vld [vmem:[#allocation5 + $0x90] sm:$0xff]
    %v109 = vld [vmem:[#allocation5 + $0x98] sm:$0xff]
    %v110 = vld [vmem:[#allocation5 + $0xa0] sm:$0xff]
    %v111 = vld [vmem:[#allocation5 + $0xa8] sm:$0xff]
    %v112 = vld [vmem:[#allocation5 + $0xb0] sm:$0xff]
    %v113 = vld [vmem:[#allocation5 + $0xb8] sm:$0xff]
    %v114 = vld [vmem:[#allocation5 + $0xc0] sm:$0xff]
    %v115 = vld [vmem:[#allocation5 + $0xc8] sm:$0xff]
    %v116 = vld [vmem:[#allocation5 + $0xd0] sm:$0xff]
    %v117 = vld [vmem:[#allocation5 + $0xd8] sm:$0xff]
    %v118 = vld [vmem:[#allocation5 + $0xe0] sm:$0xff]
    %v119 = vld [vmem:[#allocation5 + $0xe8] sm:$0xff]
    %v120 = vld [vmem:[#allocation5 + $0xf0] sm:$0xff]
    %v121 = vld [vmem:[#allocation5 + $0xf8] sm:$0xff]
    %122 = vmatprep.subr.mxu0 %v91
    %123 = vmatpush1.msra.mxu0 %v90
    %124 = vmatprep.subr.mxu0 %v93
    %125 = vmatpush1.msra.mxu0 %v92
    %126 = vmatprep.subr.mxu0 %v95
    %127 = vmatpush1.msra.mxu0 %v94
    %128 = vmatprep.subr.mxu0 %v97
    %129 = vmatpush1.msra.mxu0 %v96
    %130 = vmatprep.subr.mxu0 %v99
    %131 = vmatpush1.msra.mxu0 %v98
    %132 = vmatprep.subr.mxu0 %v101
    %133 = vmatpush1.msra.mxu0 %v100
    %134 = vmatprep.subr.mxu0 %v103
    %135 = vmatpush1.msra.mxu0 %v102
    %136 = vmatprep.subr.mxu0 %v105
    %137 = vmatpush1.msra.mxu0 %v104
    %138 = vmatprep.subr.mxu0 %v107
    %139 = vmatpush1.msra.mxu0 %v106
    %140 = vmatprep.subr.mxu0 %v109
    %141 = vmatpush1.msra.mxu0 %v108
    %142 = vmatprep.subr.mxu0 %v111
    %143 = vmatpush1.msra.mxu0 %v110
    %144 = vmatprep.subr.mxu0 %v113
    %145 = vmatpush1.msra.mxu0 %v112
    %146 = vmatprep.subr.mxu0 %v115
    %147 = vmatpush1.msra.mxu0 %v114
    %148 = vmatprep.subr.mxu0 %v117
    %149 = vmatpush1.msra.mxu0 %v116
    %150 = vmatprep.subr.mxu0 %v119
    %151 = vmatpush1.msra.mxu0 %v118
    %152 = vmatprep.subr.mxu0 %v121
    %153 = vmatpush1.msra.mxu0 %v120
    %154 = vmatprep.subr.mxu0 0.0
    %155 = vmatpush1.msra.mxu0 0.0
    %156 = vmatprep.subr.mxu0 0.0
    %157 = vmatpush1.msra.mxu0 0.0
    %158 = vmatprep.subr.mxu0 0.0
    %159 = vmatpush1.msra.mxu0 0.0
    %160 = vmatprep.subr.mxu0 0.0
    %161 = vmatpush1.msra.mxu0 0.0
    %162 = vmatprep.subr.mxu0 0.0
    %163 = vmatpush1.msra.mxu0 0.0
    %164 = vmatprep.subr.mxu0 0.0
    %165 = vmatpush1.msra.mxu0 0.0
    %166 = vmatprep.subr.mxu0 0.0
    %167 = vmatpush1.msra.mxu0 0.0
    %168 = vmatprep.subr.mxu0 0.0
    %169 = vmatpush1.msra.mxu0 0.0
    %170 = vmatprep.subr.mxu0 0.0
    %171 = vmatpush1.msra.mxu0 0.0
    %172 = vmatprep.subr.mxu0 0.0
    %173 = vmatpush1.msra.mxu0 0.0
    %174 = vmatprep.subr.mxu0 0.0
    %175 = vmatpush1.msra.mxu0 0.0
    %176 = vmatprep.subr.mxu0 0.0
    %177 = vmatpush1.msra.mxu0 0.0
    %178 = vmatprep.subr.mxu0 0.0
    %179 = vmatpush1.msra.mxu0 0.0
    %180 = vmatprep.subr.mxu0 0.0
    %181 = vmatpush1.msra.mxu0 0.0
    %182 = vmatprep.subr.mxu0 0.0
    %183 = vmatpush1.msra.mxu0 0.0
    %184 = vmatprep.subr.mxu0 0.0
    %185 = vmatpush1.msra.mxu0 0.0
    %186 = vmatprep.mubr.f32.mxu0 0.0
    %187 = vmatmul.mubr.f32.gmra.mrb[0].mxu0 %v89
    %v188 = vpop.f32.mrb[0].mxu0
    %v189 = vadd.f32 0.0, %v188
    %v190 = vpop.f32.mrb[0].mxu0
    %v191 = vadd.f32 0.0, %v190
    %192 = vdwg.mxu0
    %193 = vmatprep.subr.mxu0 %v58
    %194 = vmatpush1.msra.mxu0 %v57
    %195 = vmatprep.subr.mxu0 %v60
    %196 = vmatpush1.msra.mxu0 %v59
    %197 = vmatprep.subr.mxu0 %v62
    %198 = vmatpush1.msra.mxu0 %v61
    %199 = vmatprep.subr.mxu0 %v64
    %200 = vmatpush1.msra.mxu0 %v63
    %201 = vmatprep.subr.mxu0 %v66
    %202 = vmatpush1.msra.mxu0 %v65
    %203 = vmatprep.subr.mxu0 %v68
    %204 = vmatpush1.msra.mxu0 %v67
    %205 = vmatprep.subr.mxu0 %v70
    %206 = vmatpush1.msra.mxu0 %v69
    %207 = vmatprep.subr.mxu0 %v72
    %208 = vmatpush1.msra.mxu0 %v71
    %209 = vmatprep.subr.mxu0 %v74
    %210 = vmatpush1.msra.mxu0 %v73
    %211 = vmatprep.subr.mxu0 %v76
    %212 = vmatpush1.msra.mxu0 %v75
    %213 = vmatprep.subr.mxu0 %v78
    %214 = vmatpush1.msra.mxu0 %v77
    %215 = vmatprep.subr.mxu0 %v80
    %216 = vmatpush1.msra.mxu0 %v79
    %217 = vmatprep.subr.mxu0 %v82
    %218 = vmatpush1.msra.mxu0 %v81
    %219 = vmatprep.subr.mxu0 %v84
    %220 = vmatpush1.msra.mxu0 %v83
    %221 = vmatprep.subr.mxu0 %v86
    %222 = vmatpush1.msra.mxu0 %v85
    %223 = vmatprep.subr.mxu0 %v88
    %224 = vmatpush1.msra.mxu0 %v87
    %225 = vmatprep.subr.mxu0 0.0
    %226 = vmatpush1.msra.mxu0 0.0
    %227 = vmatprep.subr.mxu0 0.0
    %228 = vmatpush1.msra.mxu0 0.0
    %229 = vmatprep.subr.mxu0 0.0
    %230 = vmatpush1.msra.mxu0 0.0
    %231 = vmatprep.subr.mxu0 0.0
    %232 = vmatpush1.msra.mxu0 0.0
    %233 = vmatprep.subr.mxu0 0.0
    %234 = vmatpush1.msra.mxu0 0.0
    %235 = vmatprep.subr.mxu0 0.0
    %236 = vmatpush1.msra.mxu0 0.0
    %237 = vmatprep.subr.mxu0 0.0
    %238 = vmatpush1.msra.mxu0 0.0
    %239 = vmatprep.subr.mxu0 0.0
    %240 = vmatpush1.msra.mxu0 0.0
    %241 = vmatprep.subr.mxu0 0.0
    %242 = vmatpush1.msra.mxu0 0.0
    %243 = vmatprep.subr.mxu0 0.0
    %244 = vmatpush1.msra.mxu0 0.0
    %245 = vmatprep.subr.mxu0 0.0
    %246 = vmatpush1.msra.mxu0 0.0
    %247 = vmatprep.subr.mxu0 0.0
    %248 = vmatpush1.msra.mxu0 0.0
    %249 = vmatprep.subr.mxu0 0.0
    %250 = vmatpush1.msra.mxu0 0.0
    %251 = vmatprep.subr.mxu0 0.0
    %252 = vmatpush1.msra.mxu0 0.0
    %253 = vmatprep.subr.mxu0 0.0
    %254 = vmatpush1.msra.mxu0 0.0
    %255 = vmatprep.subr.mxu0 0.0
    %256 = vmatpush1.msra.mxu0 0.0
    %257 = vmatprep.mubr.f32.mxu0 0.0
    %258 = vmatmul.mubr.f32.gmra.mrb[0].mxu0 %v56
    %v259 = vpop.f32.mrb[0].mxu0
    %v260 = vadd.f32 %v189, %v259
    %v261 = vpop.f32.mrb[0].mxu0
    %v262 = vadd.f32 %v191, %v261
    %263 = vdwg.mxu0
    %v264 = vld [vmem:[%s4] sm:$0x3]
    %v266 = vlaneseq
    %v267 = vshrl.u32 %v266, 7
    %v268 = vsub.s32 0, %v267
    %v269 = vrot.slane %v264, %v268
    %v270 = vlaneseq
    %v271 = vshrl.u32 %v270, 7
    %v272 = vsub.s32 1, %v271
    %v273 = vrot.slane %v264, %v272
    %v276 = vadd.f32 %v260, %v269
    %v277 = vadd.f32 %v262, %v273
    %278 = vst [vmem:[#allocation2] sm:$0xff] %v276
    %v279 = vlaneseq
    %v280 = vand.u32 %v279, 127
    %vm281 = vcmp.lt.s32.totalorder %v280, 8
    %v282 = vsel %vm281, %v277, -1e+30
    %283 = vmax.xlane.f32.xlu0 %v282
    %v284 = vpop.xlane.xlu0 %283
    %v285 = vsub.f32 %v282, %v284
    %v286 = vmul.f32 %v285, 1.442695
    %v287 = vpow.pop %v286
    %288 = vadd.xlane.f32.xlu0 %v287
    %v289 = vpop.xlane.xlu0 %288
    %v290 = vlog2.pop %v289
    %v291 = vmul.f32 %v290, 0.6931472
    %v292 = vsub.f32 %v285, %v291
    %293 = vst [vmem:[%s5] sm:$0xff] %v292
    // Predicated region
    $region34: #{linear_rnn_sequence.1} parent=1 // pred_check
      %p294 = pneg %p50
    $region35: #{linear_rnn_sequence.1} parent=1 // pred_check_branch
      %296 = sbr.rel (%p294) target = $region37
    $region36: #{linear_rnn_sequence.1} parent=1 // pred_region
      %297 = vst [vmem:[%s6] sm:$0xff] %v276
    $region37: #{linear_rnn_sequence.1} parent=1 // pred_fallthru
      _
    // Predicated region
    $region38: #{linear_rnn_sequence.1} parent=1 // pred_check
      _
    $region39: #{linear_rnn_sequence.1} parent=1 // pred_check_branch
      %299 = sbr.rel (0) target = $region41
    $region40: #{linear_rnn_sequence.1} parent=1 // pred_region
      _
    $region41: #{linear_rnn_sequence.1} parent=1 // pred_fallthru
      _
    // Predicated region
    $region42: #{linear_rnn_sequence.1} parent=1 // pred_check
      _
    $region43: #{linear_rnn_sequence.1} parent=1 // pred_check_branch
      %301 = sbr.rel (0) target = $region45
    $region44: #{linear_rnn_sequence.1} parent=1 // pred_region
      _
    $region45: #{linear_rnn_sequence.1} parent=1 // pred_fallthru
      _
    // Predicated region
    $region46: #{linear_rnn_sequence.1} parent=1 // pred_check
      _
    $region47: #{linear_rnn_sequence.1} parent=1 // pred_check_branch
      %303 = sbr.rel (0) target = $region49
    $region48: #{linear_rnn_sequence.1} parent=1 // pred_region
      _
    $region49: #{linear_rnn_sequence.1} parent=1 // pred_fallthru
      _
    // Predicated region
    $region50: #{linear_rnn_sequence.1} parent=1 // pred_check
      _
    $region51: #{linear_rnn_sequence.1} parent=1 // pred_check_branch
      %305 = sbr.rel (0) target = $region53
    $region52: #{linear_rnn_sequence.1} parent=1 // pred_region
      _
    $region53: #{linear_rnn_sequence.1} parent=1 // pred_fallthru
      _
    %306 = vsyncpa [#allocation4], 1
    %307 = vsyncpa [#allocation6], 1

</llo_original>
